<compile_context>
chip_gen: v7x
topology: tpu7x:2x2x1
jax: 0.10.0
libtpu: 0.0.40
codegen_flags: <defaults>
</compile_context>

<pallas_src>
import functools

import jax
import jax.numpy as jnp
from jax import lax
from jax.experimental import pallas as pl
from jax.experimental.pallas import tpu as pltpu


def _hardsigmoid(v):
    # PyTorch epilogue after every conv: (x + 3).clamp(min=0, max=6) / 6
    return jnp.clip(v + 3.0, 0.0, 6.0) * (1.0 / 6.0)


def _roll_matches_numpy():
    """One-off probe of pltpu.roll's rotation direction.

    The tap shifts below depend on the sign convention (np.roll: data moves
    toward higher indices for positive shift).  A wrong sign would silently
    corrupt the convolution, so we check it once on the actual backend and
    bake the result in as a static flag.
    """
    def k(x_ref, o_ref):
        o_ref[...] = pltpu.roll(x_ref[...], shift=1, axis=1)

    x = jnp.arange(8 * 128, dtype=jnp.float32).reshape(8, 128)
    out = pl.pallas_call(
        k, out_shape=jax.ShapeDtypeStruct((8, 128), jnp.float32))(x)
    return bool(out[0, 0] == x[0, -1])          # np.roll convention


def _fused_net_kernel(S, kh, kw, n9, roll_like_numpy,
                      x_ref, w1_ref, b1_ref, w2_ref, b2_ref, o_ref, tap_ref):
    """Whole network for ONE batch element; activations stay on-chip.

    x_ref:   (1, ci, M)        zero-padded input, flattened row-stride-S layout
    w1_ref:  (co, ci)          1x1 conv weights
    b1_ref:  (co, 1)
    w2_ref:  (co, kh*kw*co)    9x9 conv weights, K index = (ky*kw + kx)*co + c
    b2_ref:  (co, 1)
    o_ref:   (1, co, M)        final activation, same flat layout (junk cols kept)
    tap_ref: (kh*kw*co, M) f32 VMEM scratch holding the lane-rolled taps
    """
    x = x_ref[0]                            # (ci, M)
    M = x.shape[-1]
    co, ci = w1_ref.shape
    w1 = w1_ref[...]
    b1 = b1_ref[...]
    b2 = b2_ref[...]

    # ---- 1x1 conv (ci -> co) + hardsigmoid: 3 VPU broadcast-MACs, no MXU.
    acc1 = b1
    for c in range(ci):
        acc1 = acc1 + w1[:, c:c + 1] * x[c:c + 1, :]   # (co,1)*(1,M) -> (co,M)
    a = _hardsigmoid(acc1)                  # (co, M) f32

    # ---- four [9x9 valid conv (co -> co) + hardsigmoid], VMEM-resident.
    for _ in range(n9):
        # Build the stacked (kh*kw*co, M) operand: one XLU lane-roll per tap,
        # written at an (8,128)-aligned row offset of the persistent scratch.
        # Roll wraparound only lands in junk columns (invariant asserted in
        # the wrapper), so no masking is needed anywhere.
        for ky in range(kh):
            for kx in range(kw):
                t = ky * kw + kx
                d = ky * S + kx
                if d == 0:
                    rolled = a
                else:
                    shift = (M - d) if roll_like_numpy else d
                    rolled = pltpu.roll(a, shift=shift, axis=1)
                tap_ref[t * co:(t + 1) * co, :] = rolled
        # One fused MXU contraction per layer (K = kh*kw*co = 648, N = M is a
        # multiple of 128 so there are no masked N tails).
        y = jnp.dot(w2_ref[...], tap_ref[...],
                    preferred_element_type=jnp.float32)
        a = _hardsigmoid(y + b2)            # (co, M) f32

    o_ref[0] = a.astype(o_ref.dtype)


def model_forward(x_nchw, params, roll_like_numpy=None):
    """out = hs(conv9(hs(conv9(hs(conv9(hs(conv9(hs(conv1(x))))))))))."""
    w1, b1, w2, b2 = params
    n, ci, h, w = x_nchw.shape
    co, ci2, kh, kw = w2.shape
    n9 = 4                                   # four `other_conv` applications

    # Shape / layout-invariant asserts (review correctness concern).
    assert kh == kw and ci2 == co, "9x9 conv must be square and co->co"
    assert w1.shape == (co, ci, 1, 1)

    if roll_like_numpy is None:
        roll_like_numpy = _roll_matches_numpy()   # only valid outside jit

    h1, S = h + 2, w + 2                     # spatial after pad=1 1x1 conv; row stride
    hf = h1 - (kh - 1) * n9                  # final spatial height
    wf = S - (kw - 1) * n9                   # final spatial width
    assert hf >= 1 and wf >= 1, "input too small for four valid 9x9 convs"

    # Flat activation width, padded to a lane-dense multiple of 128 (shared by
    # every layer): unmasked dot N-chunks and unmasked final vst.
    M = ((h1 * S + 127) // 128) * 128

    # Junk-column invariant: the deepest source any valid output ever reads is
    # inside the layer-1 extent, and roll wraparound (positions >= M - shift)
    # never reaches a valid output position of any layer.
    max_shift = (kh - 1) * S + (kw - 1)
    max_valid_out = (h1 - kh) * S + (S - kw)          # largest over all layers
    assert h1 * S <= M and max_valid_out + max_shift < M

    # Zero-pad spatially by 1 (the 1x1 conv's padding), flatten rows with
    # stride S, pad the lane axis out to M.
    xp = jnp.pad(x_nchw, ((0, 0), (0, 0), (1, 1), (1, 1)))
    xf = jnp.pad(xp.reshape(n, ci, h1 * S),
                 ((0, 0), (0, 0), (0, M - h1 * S)))

    # Weights prepared once (shared by all four 9x9 layers).
    w1m = w1.reshape(co, ci)                              # (8, 3)
    b1m = b1.reshape(co, 1)
    # (Co,Ci,Kh,Kw) -> (Co,Kh,Kw,Ci) -> (Co, Kh*Kw*Ci): K index matches the
    # scratch row order (tap-major, input-channel-minor).
    w2r = jnp.transpose(w2, (0, 2, 3, 1)).reshape(co, kh * kw * ci2)
    b2m = b2.reshape(co, 1)
    # TODO(synk): optional bf16 cast of w2r + tap scratch (2x MXU rate) was
    # left out to keep the 1e-3 numerical contract and an f32 epilogue on v5e.

    kernel = functools.partial(_fused_net_kernel, S, kh, kw, n9,
                               bool(roll_like_numpy))
    out_flat = pl.pallas_call(
        kernel,
        out_shape=jax.ShapeDtypeStruct((n, co, M), jnp.float32),
        grid=(n,),
        in_specs=[
            pl.BlockSpec((1, ci, M), lambda i: (i, 0, 0)),
            pl.BlockSpec((co, ci), lambda i: (0, 0)),
            pl.BlockSpec((co, 1), lambda i: (0, 0)),
            pl.BlockSpec((co, kh * kw * ci2), lambda i: (0, 0)),
            pl.BlockSpec((co, 1), lambda i: (0, 0)),
        ],
        out_specs=pl.BlockSpec((1, co, M), lambda i: (i, 0, 0)),
        scratch_shapes=[pltpu.VMEM((kh * kw * co, M), jnp.float32)],
        compiler_params=pltpu.CompilerParams(
            dimension_semantics=("parallel",),
            vmem_limit_bytes=32 * 1024 * 1024),
    )(xf, w1m, b1m, w2r, b2m)

    # Trim stride-S junk columns -> dense NCHW output.
    return out_flat[:, :, :hf * S].reshape(n, co, hf, S)[:, :, :, :wf]


def _ref_forward(x_nchw, params):
    """Pure-JAX reference (XLA convs) for correctness checking."""
    w1, b1, w2, b2 = params

    def conv(x, wgt, b, pad):
        y = lax.conv_general_dilated(
            x, wgt, window_strides=(1, 1),
            padding=[(pad, pad), (pad, pad)],
            dimension_numbers=("NCHW", "OIHW", "NCHW"))
        return y + b[None, :, None, None]

    def hs(x):
        return jnp.clip(x + 3.0, 0.0, 6.0) / 6.0

    h = hs(conv(x_nchw, w1, b1, 1))
    for _ in range(4):
        h = hs(conv(h, w2, b2, 0))
    return h


if __name__ == "__main__":
    key = jax.random.PRNGKey(0)
    k_x, k_w1, k_b1, k_w2, k_b2 = jax.random.split(key, 5)

    # Small shapes consistent with the module: spatial must survive the padded
    # 1x1 conv (+2) and four valid 9x9 convs (-8 each): 40 -> 42 -> 10.
    x = jax.random.normal(k_x, (2, 3, 40, 40), jnp.float32)

    # Deterministic synthetic parameters (shapes from Model.__init__)
    w1 = jax.random.normal(k_w1, (8, 3, 1, 1), jnp.float32) * 0.5
    b1 = jax.random.normal(k_b1, (8,), jnp.float32) * 0.1
    w2 = jax.random.normal(k_w2, (8, 8, 9, 9), jnp.float32) * 0.05
    b2 = jax.random.normal(k_b2, (8,), jnp.float32) * 0.1
    params = (w1, b1, w2, b2)

    roll_np = _roll_matches_numpy()
    fwd = jax.jit(functools.partial(model_forward, roll_like_numpy=roll_np))
    out = jax.block_until_ready(fwd(x, params))
    assert out.shape == (2, 8, 10, 10), out.shape

    ref = jax.block_until_ready(_ref_forward(x, params))
    err = float(jnp.max(jnp.abs(out - ref)))
    assert err < 1e-3, f"max abs err {err}"

    print("KERNEL_OK")
</pallas_src>

<mosaic_0001>
module attributes {stable_mosaic.version = 11 : i64} {
  func.func @k(%arg0: memref<8x128xf32, #tpu.memory_space<vmem>>, %arg1: memref<8x128xf32, #tpu.memory_space<vmem>>) attributes {dimension_semantics = [], scalar_prefetch = 0 : i64, scratch_operands = 0 : i64, tpu.core_type = #tpu.core_type<tc>} {
    %c0 = arith.constant 0 : index
    %c0_0 = arith.constant 0 : index
    %0 = vector.load %arg0[%c0, %c0_0] : memref<8x128xf32, #tpu.memory_space<vmem>>, vector<8x128xf32>
    %c1_i32 = arith.constant 1 : i32
    %1 = tpu.dynamic_rotate %0 by %c1_i32 dim 1 : vector<8x128xf32>, i32 -> vector<8x128xf32>
    %c0_1 = arith.constant 0 : index
    %c0_2 = arith.constant 0 : index
    %2 = vector.load %arg1[%c0_1, %c0_2] : memref<8x128xf32, #tpu.memory_space<vmem>>, vector<8x128xf32>
    tpu.vector_store %arg1[%c0_1, %c0_2], %1 {strides = array<i32>} : memref<8x128xf32, #tpu.memory_space<vmem>>, vector<8x128xf32>,
    return
  }
}

</mosaic_0001>

<llo_original>
// kernel: tpu_custom_call.1
$region0: #{tpu_custom_call.1}
  #allocation0 [shape = 'u32[]', space=smem, size = 0x4, offset = 0x4, fixed_abs, tag = 'smem constant byte address 0x4 - core index']
  #allocation1 [shape = 'u32[144,128]{1,0:T(1,128)}', space=vmem, size = 0x12000, scoped, tag = 'internal scratch']
  %s0 = inlined_call_operand.hbm [shape: f32[8,128], index: 0, kind: input, shape index: {}]
  %s1 = inlined_call_operand.hbm [shape: f32[8,128], index: 1, kind: output, shape index: {}]
  %s2 = sld [smem:[#allocation0]]
  $region18: #{tpu_custom_call.1} parent=0
    _
  %s4 = ssub.s32 1, %s2
  %s5 = scalar_select 0, %s4, %s2
  $region1: #{tpu_custom_call.1} parent=0
    #allocation2 [shape = 'u8[4096]{0}', space=vmem, size = 0x1000, scoped, tag = 'input window, operand 0, single buffered']
    #allocation3 [shape = 's32[1]{0}', space=sflag, size = 0x4, scoped, tag = 'scoped memory for tpu_custom_call.1']
    #allocation4 [shape = 's32[1]{0}', space=sflag, size = 0x4, scoped, tag = 'scoped memory for tpu_custom_call.1']
    #allocation5 [shape = 'u8[4096]{0}', space=vmem, size = 0x1000, scoped, tag = 'output window, operand 0, single buffered']
    %6 = vsyncpa [#allocation3], 0
    %7 = vsyncpa [#allocation4], 0
    // Predicated region
    $region2: #{tpu_custom_call.1} parent=1 // pred_check
      _
    $region3: #{tpu_custom_call.1} parent=1 // pred_check_branch
      %9 = sbr.rel (0) target = $region5
    $region4: #{tpu_custom_call.1} parent=1 // pred_region
      %s11 = ssub.s32 128, 128
      %12 = vsyncadd [#allocation3], %s11
      %s14 = sshll.u32 [#allocation2], 4
      %s15 = int_to_ptr.vmem [resolvable:$true] %s14
      %17 = dma.hbm_to_vmem [thread:$0]  %s0, 128, %s15, [#allocation3]
    $region5: #{tpu_custom_call.1} parent=1 // pred_fallthru
      _
    // Predicated region
    $region6: #{tpu_custom_call.1} parent=1 // pred_check
      _
    $region7: #{tpu_custom_call.1} parent=1 // pred_check_branch
      %19 = sbr.rel (0) target = $region9
    $region8: #{tpu_custom_call.1} parent=1 // pred_region
      %20 = dma.done [#allocation3], 128
    $region9: #{tpu_custom_call.1} parent=1 // pred_fallthru
      _
    %v21 = vld [vmem:[#allocation2] sm:$0xff]
    %22 = vrot.lane.b32.xlu0 %v21, 1
    %v23 = vpop.permute.xlu0 %22
    %24 = vst [vmem:[#allocation5] sm:$0xff] %v23
    // Predicated region
    $region10: #{tpu_custom_call.1} parent=1 // pred_check
      _
    $region11: #{tpu_custom_call.1} parent=1 // pred_check_branch
      %26 = sbr.rel (0) target = $region13
    $region12: #{tpu_custom_call.1} parent=1 // pred_region
      %s28 = ssub.s32 128, 128
      %29 = vsyncadd [#allocation4], %s28
      %s31 = sshll.u32 [#allocation5], 4
      %s32 = int_to_ptr.vmem [resolvable:$true] %s31
      %34 = dma.vmem_to_hbm [thread:$0]  %s32, 128, %s1, [#allocation4]
    $region13: #{tpu_custom_call.1} parent=1 // pred_fallthru
      _
    // Predicated region
    $region14: #{tpu_custom_call.1} parent=1 // pred_check
      _
    $region15: #{tpu_custom_call.1} parent=1 // pred_check_branch
      %36 = sbr.rel (0) target = $region17
    $region16: #{tpu_custom_call.1} parent=1 // pred_region
      %37 = dma.done [#allocation4], 128
    $region17: #{tpu_custom_call.1} parent=1 // pred_fallthru
      _
    %38 = vsyncpa [#allocation3], 1
    %39 = vsyncpa [#allocation4], 1

</llo_original>
